<compile_context>
chip_gen: v5e
topology: v5e:2x2
jax: 0.10.0
libtpu: 0.0.40
codegen_flags: <defaults>
</compile_context>

<pallas_src>
import jax
import jax.numpy as jnp
import numpy as np
from jax.experimental import pallas as pl
from jax.experimental.pallas import tpu as pltpu


# ---------------------------------------------------------------------------
# Pallas kernel: direct HBM -> HBM DMA copy (materializing path).
# ---------------------------------------------------------------------------

def _dma_identity_copy_kernel(h_ref, c_ref, h_out_ref, c_out_ref, sem):
    """Copy h and c straight from HBM to HBM with two hardware DMAs.

    No VMEM staging and no vector loads/stores: the TensorCore only issues two
    DMA descriptors and two waits; the DMA engines move the bytes at the HBM
    roofline regardless of chip generation or state shape/layout.
    """
    h_cp = pltpu.make_async_copy(h_ref, h_out_ref, sem.at[0])
    c_cp = pltpu.make_async_copy(c_ref, c_out_ref, sem.at[1])
    h_cp.start()
    c_cp.start()
    h_cp.wait()
    c_cp.wait()


def identity_transfer_copy(h, c):
    """Materializing identity: copy h, c into fresh output buffers.

    Use only when the caller genuinely needs new buffers (e.g. the inputs are
    donated elsewhere).  Implemented as two direct HBM->HBM async DMAs.
    """
    assert h.shape == c.shape and h.dtype == c.dtype
    any_spec = pl.BlockSpec(memory_space=pl.ANY)  # leave data in HBM, no auto-DMA
    bytes_accessed = 2 * (h.size * h.dtype.itemsize + c.size * c.dtype.itemsize)
    return pl.pallas_call(
        _dma_identity_copy_kernel,
        out_shape=(
            jax.ShapeDtypeStruct(h.shape, h.dtype),
            jax.ShapeDtypeStruct(c.shape, c.dtype),
        ),
        in_specs=[any_spec, any_spec],
        out_specs=(any_spec, any_spec),
        scratch_shapes=[pltpu.SemaphoreType.DMA((2,))],
        cost_estimate=pl.CostEstimate(
            flops=0, transcendentals=0, bytes_accessed=bytes_accessed),
    )(h, c)


# ---------------------------------------------------------------------------
# Primary path: the module's forward — a pure identity, so no kernel at all.
# ---------------------------------------------------------------------------

def identity_transfer(h, c, **kwargs):
    """Equivalent of IdentityTransfer.forward(h, c) -> (h, c).

    A pure identity moves zero bytes.  Launching even an empty aliased Pallas
    kernel only adds custom-call dispatch overhead, so the kernel is elided
    and the inputs are returned directly (same semantics as the PyTorch
    module, which returns the very same tensors).  Callers that require fresh
    output buffers should use `identity_transfer_copy`.
    """
    del kwargs
    return (h, c)


if __name__ == "__main__":
    key = jax.random.PRNGKey(0)
    kh, kc = jax.random.split(key)

    # Small (batch, hidden) LSTM state shapes, mirroring the PyTorch module.
    batch, hidden = 2, 32
    h = jax.random.normal(kh, (batch, hidden), dtype=jnp.float32)
    c = jax.random.normal(kc, (batch, hidden), dtype=jnp.float32)
    h_np = np.asarray(h)
    c_np = np.asarray(c)

    # --- primary path: zero-cost identity (no kernel launched) --------------
    h_out, c_out = identity_transfer(h, c)
    jax.block_until_ready((h_out, c_out))
    assert h_out.shape == (batch, hidden) and c_out.shape == (batch, hidden)
    assert h_out.dtype == jnp.float32 and c_out.dtype == jnp.float32
    assert np.array_equal(np.asarray(h_out), h_np)
    assert np.array_equal(np.asarray(c_out), c_np)

    # --- materializing variant: tiny, non-128-divisible state ---------------
    # Goes straight through the layout-agnostic HBM->HBM DMA path; no
    # lane-dense reshaping or padding is needed.
    h_cp, c_cp = identity_transfer_copy(h, c)
    jax.block_until_ready((h_cp, c_cp))
    assert h_cp.shape == (batch, hidden) and c_cp.shape == (batch, hidden)
    assert h_cp.dtype == jnp.float32 and c_cp.dtype == jnp.float32
    assert np.array_equal(np.asarray(h_cp), h_np)
    assert np.array_equal(np.asarray(c_cp), c_np)

    # --- materializing variant: tile-aligned state, under jit ---------------
    kh2, kc2 = jax.random.split(jax.random.PRNGKey(1))
    h2 = jax.random.normal(kh2, (8, 128), dtype=jnp.float32)
    c2 = jax.random.normal(kc2, (8, 128), dtype=jnp.float32)
    h2_cp, c2_cp = jax.jit(identity_transfer_copy)(h2, c2)
    jax.block_until_ready((h2_cp, c2_cp))
    assert np.array_equal(np.asarray(h2_cp), np.asarray(h2))
    assert np.array_equal(np.asarray(c2_cp), np.asarray(c2))

    print("KERNEL_OK")
</pallas_src>

<mosaic_0001>
module attributes {stable_mosaic.version = 11 : i64} {
  func.func @_dma_identity_copy_kernel(%arg0: memref<2x32xf32, #tpu.memory_space<any>>, %arg1: memref<2x32xf32, #tpu.memory_space<any>>, %arg2: memref<2x32xf32, #tpu.memory_space<any>>, %arg3: memref<2x32xf32, #tpu.memory_space<any>>, %arg4: memref<2x!tpu.dma_semaphore, #tpu.memory_space<semaphore_mem>>) attributes {dimension_semantics = [], scalar_prefetch = 0 : i64, scratch_operands = 1 : i64, tpu.core_type = #tpu.core_type<tc>} {
    %c0_i32 = arith.constant 0 : i32
    %0 = tpu.memref_slice %arg4[%c0_i32] : memref<2x!tpu.dma_semaphore, #tpu.memory_space<semaphore_mem>> -> memref<1x!tpu.dma_semaphore, #tpu.memory_space<semaphore_mem>>
    %1 = tpu.memref_squeeze %0 : memref<1x!tpu.dma_semaphore, #tpu.memory_space<semaphore_mem>> -> memref<!tpu.dma_semaphore, #tpu.memory_space<semaphore_mem>>
    tpu.enqueue_dma source(%arg0 : memref<2x32xf32, #tpu.memory_space<any>>) target(%arg2 : memref<2x32xf32, #tpu.memory_space<any>>) target_semaphore(%1 : memref<!tpu.dma_semaphore, #tpu.memory_space<semaphore_mem>>)
    %c1_i32 = arith.constant 1 : i32
    %2 = tpu.memref_slice %arg4[%c1_i32] : memref<2x!tpu.dma_semaphore, #tpu.memory_space<semaphore_mem>> -> memref<1x!tpu.dma_semaphore, #tpu.memory_space<semaphore_mem>>
    %3 = tpu.memref_squeeze %2 : memref<1x!tpu.dma_semaphore, #tpu.memory_space<semaphore_mem>> -> memref<!tpu.dma_semaphore, #tpu.memory_space<semaphore_mem>>
    tpu.enqueue_dma source(%arg1 : memref<2x32xf32, #tpu.memory_space<any>>) target(%arg3 : memref<2x32xf32, #tpu.memory_space<any>>) target_semaphore(%3 : memref<!tpu.dma_semaphore, #tpu.memory_space<semaphore_mem>>)
    %c0_i32_0 = arith.constant 0 : i32
    %4 = tpu.memref_slice %arg4[%c0_i32_0] : memref<2x!tpu.dma_semaphore, #tpu.memory_space<semaphore_mem>> -> memref<1x!tpu.dma_semaphore, #tpu.memory_space<semaphore_mem>>
    %5 = tpu.memref_squeeze %4 : memref<1x!tpu.dma_semaphore, #tpu.memory_space<semaphore_mem>> -> memref<!tpu.dma_semaphore, #tpu.memory_space<semaphore_mem>>
    tpu.wait_dma2 semaphore(%5 : memref<!tpu.dma_semaphore, #tpu.memory_space<semaphore_mem>>) src(%arg0 : memref<2x32xf32, #tpu.memory_space<any>>) dst(%arg2 : memref<2x32xf32, #tpu.memory_space<any>>)
    %c1_i32_1 = arith.constant 1 : i32
    %6 = tpu.memref_slice %arg4[%c1_i32_1] : memref<2x!tpu.dma_semaphore, #tpu.memory_space<semaphore_mem>> -> memref<1x!tpu.dma_semaphore, #tpu.memory_space<semaphore_mem>>
    %7 = tpu.memref_squeeze %6 : memref<1x!tpu.dma_semaphore, #tpu.memory_space<semaphore_mem>> -> memref<!tpu.dma_semaphore, #tpu.memory_space<semaphore_mem>>
    tpu.wait_dma2 semaphore(%7 : memref<!tpu.dma_semaphore, #tpu.memory_space<semaphore_mem>>) src(%arg1 : memref<2x32xf32, #tpu.memory_space<any>>) dst(%arg3 : memref<2x32xf32, #tpu.memory_space<any>>)
    return
  }
}

</mosaic_0001>

<llo_original>
// kernel: tpu_custom_call.1
$region0: #{tpu_custom_call.1}
  #allocation0 [shape = 'u32[]', space=smem, size = 0x4, offset = 0x4, fixed_abs, tag = 'smem constant byte address 0x4 - core index']
  #allocation1 [shape = 'u32[72,128]{1,0:T(1,128)}', space=vmem, size = 0x9000, scoped, tag = 'internal scratch']
  #allocation2 [shape = 's32[2]{0}', space=sflag, size = 0x8, scoped, tag = 'scratch operand']
  #allocation3 [shape = 's32[]', space=sflag, size = 0x4, offset = 0, fixed_abs, tag = 'sflag constant byte address 0x0 - dummy sync flag']
  #allocation4 [shape = 'u32[0]{0}', space=smem, size = 0, offset = 0, fixed_abs, tag = 'smem constant byte address 0x0 - null']
  #allocation5 [shape = 's32[]', space=sflag, size = 0x4, offset = 0, fixed_abs, tag = 'sflag constant byte address 0x0 - dummy sync flag']
  #allocation6 [shape = 'u32[0]{0}', space=smem, size = 0, offset = 0, fixed_abs, tag = 'smem constant byte address 0x0 - null']
  %s0 = inlined_call_operand.hbm [shape: f32[2,32], index: 0, kind: input, shape index: {}]
  %s1 = inlined_call_operand.hbm [shape: f32[2,32], index: 1, kind: input, shape index: {}]
  %s2 = inlined_call_operand.hbm [shape: f32[2,32], index: 2, kind: output, shape index: {0}]
  %s3 = inlined_call_operand.hbm [shape: f32[2,32], index: 3, kind: output, shape index: {1}]
  %4 = xla_tuple %s2, %s3
  %s5 = sld [smem:[#allocation0]]
  $region2: #{tpu_custom_call.1} parent=0
    _
  %s7 = ssub.s32 1, %s5
  %s8 = scalar_select 0, %s7, %s5
  %s10 = sshll.u32 1, 14
  %s11 = sxor.u32 4294967295, %s10
  %s13 = sshll.u32 %s0, 4
  %s14 = int_to_ptr.hbm [resolvable:$true] %s13
  %s15 = sshll.u32 %s2, 4
  %s16 = int_to_ptr.hbm [resolvable:$true] %s15
  %19 = dma.general %s14, 32, %s16, [#allocation2], [#allocation3], [#allocation4], 0, 0
  %s20 = scalar_lea.sflag [#allocation2], 1
  %s22 = sshll.u32 1, 14
  %s23 = sxor.u32 4294967295, %s22
  %s25 = sshll.u32 %s1, 4
  %s26 = int_to_ptr.hbm [resolvable:$true] %s25
  %s27 = sshll.u32 %s3, 4
  %s28 = int_to_ptr.hbm [resolvable:$true] %s27
  %31 = dma.general %s26, 32, %s28, %s20, [#allocation5], [#allocation6], 0, 0
  %s32 = smul.u32 2, 1
  %s33 = sshll.u32 %s32, 4
  %34 = dma.done [#allocation2], %s33
  %s35 = sshll.u32 %s32, 4
  %36 = dma.done %s20, %s35
  %37 = vsyncmov [#allocation2]
  %s38 = vpop.sfrf %37
  %p39 = scmp.eq.s32.totalorder %s38, 0
  %p40 = pneg %p39
  %42 = shalt.err (%p40)
  %s43 = scalar_lea.sflag [#allocation2], 1
  %44 = vsyncmov %s43
  %s45 = vpop.sfrf %44
  %p46 = scmp.eq.s32.totalorder %s45, 0
  %p47 = pneg %p46
  %49 = shalt.err (%p47)

</llo_original>
